<compile_context>
chip_gen: v7x
topology: tpu7x:2x2x1
jax: 0.10.0
libtpu: 0.0.40
codegen_flags: <defaults>
</compile_context>

<pallas_src>
import jax
import jax.numpy as jnp
from jax.experimental import pallas as pl
from jax.experimental.pallas import tpu as pltpu


def _shifted_relu_kernel(x_ref, lam_ref, o_ref):
    # x_ref: (tb, tn) tile, lam_ref: (1, tn) f32 row (constant block index along
    # the inner grid axis -> effectively resident). Upcast to f32 (no-op for f32
    # inputs), add + max on the VPU, cast on store. Kernel is HBM-bandwidth bound.
    x = x_ref[...].astype(jnp.float32)
    o_ref[...] = jnp.maximum(x + lam_ref[...], 0.0).astype(o_ref.dtype)


def _round_up(a, m):
    return ((a + m - 1) // m) * m


def _vmem_budget_bytes():
    """Generation-aware scoped-VMEM budget (v7x: 64 MiB physical -> ~48 MiB)."""
    try:
        cap = int(pltpu.get_tpu_info().vmem_capacity_bytes)
    except Exception:
        cap = 64 * 1024 * 1024  # conservative fallback = v7x per-TensorCore VMEM
    return min((cap * 3) // 4, 96 * 1024 * 1024)


def _lane_tile(N, itemsize, max_lane_bytes):
    """Full-dim lane block whenever it fits (no masked partial stores);
    otherwise the largest 128-multiple <= cap that divides N (no masked edge),
    else a wide 128-multiple with one masked edge block."""
    if N * itemsize <= max_lane_bytes:
        return N  # full-dim last-dim block: exempt from the 128 rule
    max_lanes = max(128, ((max_lane_bytes // itemsize) // 128) * 128)
    t = max_lanes
    while t >= 128:
        if N % t == 0:
            return t
        t -= 128
    return max_lanes


def _tile_sizes(B, N, itemsize, vmem_budget):
    # Sublane granularity: 8 rows for 32-bit, 16 for 16-bit, 32 for 8-bit.
    sub = 8 if itemsize >= 4 else (16 if itemsize == 2 else 32)
    # Lane width capped so a single row never dominates the VMEM budget.
    tn = _lane_tile(N, itemsize, min(8 * 1024 * 1024, vmem_budget // 8))
    lam_bytes = 2 * tn * 4  # lambda row, double-buffered worst case
    # 4 big tiles live at once (double-buffered x + out); leave 2 MiB headroom.
    tile_budget = max(tn * itemsize * sub,
                      (vmem_budget - lam_bytes - (2 << 20)) // 4)
    rows = max(sub, tile_budget // (tn * itemsize))
    tb_cand = max(sub, (rows // sub) * sub)
    tb = B if B <= tb_cand else tb_cand
    # Megacore (v7x has 2 TensorCores): keep >=2 blocks when the shape allows.
    if pl.cdiv(N, tn) * pl.cdiv(B, tb) < 2 and B >= 2 * sub:
        tb = max(sub, _round_up(-(-B // 2), sub))
    return tb, tn


def shifted_relu_2d(x2, lam_row, *, donate_x=False):
    """out = relu(x2 + lam_row); x2: (B, N) float array, lam_row: (1, N) f32."""
    B, N = x2.shape
    assert lam_row.shape == (1, N)
    itemsize = jnp.dtype(x2.dtype).itemsize
    vmem_budget = _vmem_budget_bytes()
    tb, tn = _tile_sizes(B, N, itemsize, vmem_budget)

    # Lanes outer, rows inner: the lambda tile's block index is constant along
    # the inner axis, so it is not re-fetched every step.
    grid = (pl.cdiv(N, tn), pl.cdiv(B, tb))

    return pl.pallas_call(
        _shifted_relu_kernel,
        out_shape=jax.ShapeDtypeStruct((B, N), x2.dtype),
        grid_spec=pltpu.PrefetchScalarGridSpec(
            num_scalar_prefetch=0,
            grid=grid,
            in_specs=[
                pl.BlockSpec((tb, tn), lambda j, i: (i, j)),
                pl.BlockSpec((1, tn), lambda j, i: (0, j)),
            ],
            out_specs=pl.BlockSpec((tb, tn), lambda j, i: (i, j)),
        ),
        compiler_params=pltpu.CompilerParams(
            # Independent elementwise tiles: both axes parallel (shards across
            # the 2 TensorCores on v7x; neutral on v5e/v6e).
            dimension_semantics=("parallel", "parallel"),
            vmem_limit_bytes=int(vmem_budget),
        ),
        cost_estimate=pl.CostEstimate(
            flops=2 * B * N,                              # add + max per element
            transcendentals=0,
            bytes_accessed=2 * B * N * itemsize + N * 4,  # read x, write out, read lam
        ),
        input_output_aliases=({0: 0} if donate_x else {}),
    )(x2, lam_row)


def shifted_relu(x, lambdas, *, donate_x=False):
    """Convenience wrapper: out = relu(x + lambdas); x: (B, C, L), lambdas: (1, C, 1)."""
    B, C, L = x.shape
    assert lambdas.shape == (1, C, 1)
    lam_row = jnp.broadcast_to(lambdas.astype(jnp.float32), (1, C, L)).reshape(1, C * L)
    out2 = shifted_relu_2d(x.reshape(B, C * L), lam_row, donate_x=donate_x)
    return out2.reshape(B, C, L)


class ReLUModule:
    """JAX/Pallas port of NISTA_Net.ReLU: relu(x + lambdas), lambdas is (1, chan_num, 1)."""

    def __init__(self, chan_num, init_lambdas=0.001):
        # Same deterministic init as init_lambdas * torch.ones(1, chan_num, 1).
        self.chan_num = chan_num
        self.lambdas = jnp.full((1, chan_num, 1), init_lambdas, dtype=jnp.float32)
        # Pre-broadcast lambda row cached per L: hoisted out of the per-call path.
        self._lam_row_cache = {}

    def _lam_row(self, L):
        row = self._lam_row_cache.get(L)
        if row is None:
            row = jnp.broadcast_to(self.lambdas, (1, self.chan_num, L)).reshape(
                1, self.chan_num * L)
            self._lam_row_cache[L] = row
        return row

    def __call__(self, x, *, donate_x=False):
        B, C, L = x.shape
        assert C == self.chan_num
        out2 = shifted_relu_2d(x.reshape(B, C * L), self._lam_row(L), donate_x=donate_x)
        return out2.reshape(B, C, L)


if __name__ == "__main__":
    key = jax.random.PRNGKey(0)

    def _check(B, C, L, k, dtype=jnp.float32):
        x = jax.random.normal(k, (B, C, L), dtype=jnp.float32).astype(dtype)
        mod = ReLUModule(chan_num=C, init_lambdas=0.001)
        out = jax.block_until_ready(mod(x))
        ref = jnp.maximum(x.astype(jnp.float32) + mod.lambdas, 0.0).astype(dtype)
        assert out.shape == (B, C, L)
        assert out.dtype == dtype
        assert jnp.allclose(out.astype(jnp.float32), ref.astype(jnp.float32),
                            atol=1e-6), f"mismatch vs reference at {(B, C, L, dtype)}"

    k0, k1, k2, k3 = jax.random.split(key, 4)
    _check(2, 4, 16, k0)                      # tiny: full-dim (2, 64) block
    _check(3, 8, 40, k1)                      # N=320: full-dim lane block, no masked edge
    _check(16, 8, 256, k2)                    # N=2048: row axis split into 2 blocks (megacore)
    _check(4, 8, 64, k3, dtype=jnp.bfloat16)  # bf16 storage, f32 compute in-kernel

    print("KERNEL_OK")
</pallas_src>

<mosaic_0001>
module attributes {stable_mosaic.version = 11 : i64} {
  func.func @_shifted_relu_kernel(%arg0: i32, %arg1: i32, %arg2: memref<2x64xf32, #tpu.memory_space<vmem>>, %arg3: memref<1x64xf32, #tpu.memory_space<vmem>>, %arg4: memref<2x64xf32, #tpu.memory_space<vmem>>) attributes {dimension_semantics = [#tpu.dimension_semantics<parallel>, #tpu.dimension_semantics<parallel>], iteration_bounds = array<i64: 1, 1>, scalar_prefetch = 0 : i64, scratch_operands = 0 : i64, tpu.core_type = #tpu.core_type<tc>, window_params = [{transform_indices = @transform_0, window_bounds = array<i64: 2, 64>}, {transform_indices = @transform_1, window_bounds = array<i64: 1, 64>}, {transform_indices = @transform_2, window_bounds = array<i64: 2, 64>}]} {
    %c0 = arith.constant 0 : index
    %c0_0 = arith.constant 0 : index
    %0 = vector.load %arg2[%c0, %c0_0] : memref<2x64xf32, #tpu.memory_space<vmem>>, vector<2x64xf32>
    %c0_1 = arith.constant 0 : index
    %c0_2 = arith.constant 0 : index
    %1 = vector.load %arg3[%c0_1, %c0_2] : memref<1x64xf32, #tpu.memory_space<vmem>>, vector<1x64xf32>
    %2 = vector.broadcast %1 : vector<1x64xf32> to vector<2x64xf32>
    %3 = arith.addf %0, %2 : vector<2x64xf32>
    %cst = arith.constant 0.000000e+00 : f32
    %4 = vector.broadcast %cst : f32 to vector<2x64xf32>
    %5 = arith.maximumf %3, %4 : vector<2x64xf32>
    %c0_3 = arith.constant 0 : index
    %c0_4 = arith.constant 0 : index
    %6 = vector.load %arg4[%c0_3, %c0_4] : memref<2x64xf32, #tpu.memory_space<vmem>>, vector<2x64xf32>
    tpu.vector_store %arg4[%c0_3, %c0_4], %5 {strides = array<i32>} : memref<2x64xf32, #tpu.memory_space<vmem>>, vector<2x64xf32>,
    return
  }
  func.func @transform_0(%arg0: i32, %arg1: i32) -> (i32, i32) {
    %c0_i32 = arith.constant 0 : i32
    return %arg1, %arg0 : i32, i32
  }
  func.func @transform_1(%arg0: i32, %arg1: i32) -> (i32, i32) {
    %c0_i32 = arith.constant 0 : i32
    %c0_i32_0 = arith.constant 0 : i32
    return %c0_i32, %arg0 : i32, i32
  }
  func.func @transform_2(%arg0: i32, %arg1: i32) -> (i32, i32) {
    %c0_i32 = arith.constant 0 : i32
    return %arg1, %arg0 : i32, i32
  }
}

</mosaic_0001>

<llo_original>
// kernel: tpu_custom_call.1
$region0: #{tpu_custom_call.1}
  #allocation0 [shape = 'u32[]', space=smem, size = 0x4, offset = 0x4, fixed_abs, tag = 'smem constant byte address 0x4 - core index']
  #allocation1 [shape = 'u32[144,128]{1,0:T(1,128)}', space=vmem, size = 0x12000, scoped, tag = 'internal scratch']
  %s0 = inlined_call_operand.hbm [shape: f32[2,64], index: 0, kind: input, shape index: {}]
  %s1 = inlined_call_operand.vmem [shape: f32[1,64], index: 1, kind: input, shape index: {}]
  %s2 = inlined_call_operand.hbm [shape: f32[2,64], index: 2, kind: output, shape index: {}]
  %s3 = sld [smem:[#allocation0]]
  $region22: #{tpu_custom_call.1} parent=0
    _
  %s5 = ssub.s32 1, %s3
  %s6 = scalar_select 0, %s5, %s3
  $region1: #{tpu_custom_call.1} parent=0
    #allocation2 [shape = 'u8[1024]{0}', space=vmem, size = 0x400, scoped, tag = 'input window, operand 0, single buffered']
    #allocation3 [shape = 's32[1]{0}', space=sflag, size = 0x4, scoped, tag = 'scoped memory for tpu_custom_call.1']
    #allocation4 [shape = 's32[1]{0}', space=sflag, size = 0x4, scoped, tag = 'scoped memory for tpu_custom_call.1']
    #allocation5 [shape = 'u8[1024]{0}', space=vmem, size = 0x400, scoped, tag = 'output window, operand 0, single buffered']
    %7 = vsyncpa [#allocation3], 0
    %8 = vsyncpa [#allocation4], 0
    // Predicated region
    $region2: #{tpu_custom_call.1} parent=1 // pred_check
      _
    $region3: #{tpu_custom_call.1} parent=1 // pred_check_branch
      %10 = sbr.rel (0) target = $region5
    $region4: #{tpu_custom_call.1} parent=1 // pred_region
      %s12 = ssub.s32 32, 32
      %13 = vsyncadd [#allocation3], %s12
      %s15 = sshll.u32 [#allocation2], 4
      %s16 = int_to_ptr.vmem [resolvable:$true] %s15
      %18 = dma.hbm_to_vmem [thread:$0]  %s0, 32, %s16, [#allocation3]
    $region5: #{tpu_custom_call.1} parent=1 // pred_fallthru
      _
    // Predicated region
    $region6: #{tpu_custom_call.1} parent=1 // pred_check
      _
    $region7: #{tpu_custom_call.1} parent=1 // pred_check_branch
      %20 = sbr.rel (0) target = $region9
    $region8: #{tpu_custom_call.1} parent=1 // pred_region
      _
    $region9: #{tpu_custom_call.1} parent=1 // pred_fallthru
      _
    // Predicated region
    $region10: #{tpu_custom_call.1} parent=1 // pred_check
      _
    $region11: #{tpu_custom_call.1} parent=1 // pred_check_branch
      %22 = sbr.rel (0) target = $region13
    $region12: #{tpu_custom_call.1} parent=1 // pred_region
      %23 = dma.done [#allocation3], 32
    $region13: #{tpu_custom_call.1} parent=1 // pred_fallthru
      _
    %v24 = vld [vmem:[#allocation2] sm:$0x3]
    %v25 = vld [vmem:[%s1] sm:$0x1]
    %v27 = vlaneseq
    %v28 = vshrl.u32 %v27, 7
    %v29 = vsub.s32 0, %v28
    %v30 = vrot.slane %v25, %v29
    %v32 = vadd.f32 %v24, %v30
    %v33 = vmax.f32 %v32, 0.0
    %vm34 = vcmask 517120
    %35 = vst.msk [vmem:[#allocation5] sm:$0x3] %vm34, %v33
    // Predicated region
    $region14: #{tpu_custom_call.1} parent=1 // pred_check
      _
    $region15: #{tpu_custom_call.1} parent=1 // pred_check_branch
      %37 = sbr.rel (0) target = $region17
    $region16: #{tpu_custom_call.1} parent=1 // pred_region
      %s39 = ssub.s32 32, 32
      %40 = vsyncadd [#allocation4], %s39
      %s42 = sshll.u32 [#allocation5], 4
      %s43 = int_to_ptr.vmem [resolvable:$true] %s42
      %45 = dma.vmem_to_hbm [thread:$0]  %s43, 32, %s2, [#allocation4]
    $region17: #{tpu_custom_call.1} parent=1 // pred_fallthru
      _
    // Predicated region
    $region18: #{tpu_custom_call.1} parent=1 // pred_check
      _
    $region19: #{tpu_custom_call.1} parent=1 // pred_check_branch
      %47 = sbr.rel (0) target = $region21
    $region20: #{tpu_custom_call.1} parent=1 // pred_region
      %48 = dma.done [#allocation4], 32
    $region21: #{tpu_custom_call.1} parent=1 // pred_fallthru
      _
    %49 = vsyncpa [#allocation3], 1
    %50 = vsyncpa [#allocation4], 1

</llo_original>
